<compile_context>
chip_gen: v5e
topology: v5e:2x2
jax: 0.10.0
libtpu: 0.0.40
codegen_flags: <defaults>
</compile_context>

<pallas_src>
import jax
import jax.numpy as jnp
from jax.experimental import pallas as pl
from jax.experimental.pallas import tpu as pltpu


def _round_up(x, m):
    return ((x + m - 1) // m) * m


def make_convnet_kernel(tb, s_pad, e, w, t2, l_out, f_pad, k_pad):
    def kernel(x_ref, wconv_ref, bconv_ref, wfc_ref, bfc_ref, out_ref):
        # x_ref:     (tb, s_pad, e)  bf16   -- TB batch rows, (maybe) time-padded
        # wconv_ref: (w, e, f_pad)   bf16   -- Conv1d weight, one (E, Fp) slab per tap
        # bconv_ref: (1, f_pad)      f32
        # wfc_ref:   (f_pad, k_pad)  f32
        # bfc_ref:   (1, k_pad)      f32
        # out_ref:   (tb, k_pad)     f32
        x = x_ref[...]

        # Conv1d as W accumulated MXU matmuls: for tap i, multiply the
        # time-shifted view (tb*t2, e) by its (e, f_pad) weight slab and add.
        # tb % 8 == 0 and t2 % 8 == 0 keep the (tb, t2, e)->(tb*t2, e) merge
        # sublane-aligned.  f32 accumulation throughout.
        def tap(i):
            xi = x[:, i:i + t2, :].reshape(tb * t2, e)
            return jnp.dot(xi, wconv_ref[i], preferred_element_type=jnp.float32)

        acc = tap(0)
        for i in range(1, w):
            acc = acc + tap(i)

        acc = acc + bconv_ref[...]            # broadcast (1, f_pad)
        acc = jnp.maximum(acc, 0.0)           # ReLU (VPU)
        acc = acc.reshape(tb, t2, f_pad)

        # Drop conv rows past the valid length L before the max-pool.  The
        # time-padding rows of x are zeros, so those conv rows hold ReLU(bias)
        # and would otherwise leak into the max.
        if t2 > l_out:
            acc = acc[:, :l_out, :]
        pooled = jnp.max(acc, axis=1)         # (tb, f_pad), f32

        # FC stays fully f32: tiny matmul, tighter numerics.
        out = jnp.dot(pooled, wfc_ref[...],
                      preferred_element_type=jnp.float32) + bfc_ref[...]
        out_ref[...] = out.astype(out_ref.dtype)

    return kernel


def _pick_batch_tile(b, s_pad, e, t2, f_pad, target, vmem_budget):
    """Largest sensible batch tile: big DMA blocks, capped by VMEM and by B."""
    # Rough per-batch-row live VMEM (bytes):
    #   x double-buffer (bf16):          2 * s_pad * e * 2
    #   shifted-view temporaries (~2):   2 * t2 * e * 2
    #   f32 conv accumulator:            t2 * f_pad * 4
    per_row = 2 * s_pad * e * 2 + 2 * t2 * e * 2 + t2 * f_pad * 4
    cap = max(8, (vmem_budget // per_row) // 8 * 8)
    tb = min(target, cap, _round_up(b, 8))
    # Keep >= ~4 grid steps when B allows so the "parallel" batch axis can
    # load-balance across v7x's 2 TensorCores (but never below 32 rows/step).
    if b >= 128:
        tb = min(tb, max(32, _round_up((b + 3) // 4, 8)))
    return max(8, (tb // 8) * 8)


def convnet_for_text(x, conv_weight, conv_bias, fc_weight, fc_bias, *,
                     batch_tile=128, vmem_budget_bytes=20 << 20):
    """Forward pass of ConvNetForText.

    x:           (B, S, E) f32 or bf16 -- the PyTorch input BEFORE x.permute(0, 2, 1)
    conv_weight: (F, E, W)             -- PyTorch Conv1d weight (out, in, kernel)
    conv_bias:   (F,)
    fc_weight:   (K, F)                -- PyTorch Linear weight
    fc_bias:     (K,)
    returns:     (B, K) f32
    """
    B, S, E = x.shape
    F, E2, W = conv_weight.shape
    assert E2 == E
    K, F2 = fc_weight.shape
    assert F2 == F
    L = S - W + 1
    assert L >= 1

    LANE, SUB = 128, 8
    Fp = _round_up(F, LANE)        # lane-dense filters (padded cols provably inert)
    Kp = _round_up(K, LANE)        # lane-dense output -> unmasked stores
    T2 = _round_up(L, SUB)         # sublane-aligned conv-row count
    S_pad = max(S, T2 + W - 1)     # pad time only when the shifted slices need it

    TB = _pick_batch_tile(B, S_pad, E, T2, Fp, batch_tile, vmem_budget_bytes)
    Bp = _round_up(B, TB)

    # --- one-time parameter repacking ---
    # Conv1d weight (F, E, W) -> (W, E, Fp), bf16; padded filter columns are 0.
    wc = jnp.transpose(conv_weight, (2, 1, 0))
    wc = jnp.pad(wc, ((0, 0), (0, 0), (0, Fp - F))).astype(jnp.bfloat16)
    bc = jnp.pad(conv_bias.astype(jnp.float32), (0, Fp - F)).reshape(1, Fp)
    # Linear weight stays f32 (tiny); (K, F) -> (Fp, Kp). Padded rows/cols are 0,
    # so the zero-valued padded filter columns of `pooled` contribute nothing.
    wf = jnp.pad(jnp.transpose(fc_weight).astype(jnp.float32),
                 ((0, Fp - F), (0, Kp - K)))
    bf = jnp.pad(fc_bias.astype(jnp.float32), (0, Kp - K)).reshape(1, Kp)

    # --- minimal input pre-pass: pad only what is needed, cast only if needed ---
    xp = x
    if Bp > B or S_pad > S:
        xp = jnp.pad(xp, ((0, Bp - B), (0, S_pad - S), (0, 0)))
    if xp.dtype != jnp.bfloat16:
        xp = xp.astype(jnp.bfloat16)

    kernel = make_convnet_kernel(TB, S_pad, E, W, T2, L, Fp, Kp)

    out = pl.pallas_call(
        kernel,
        out_shape=jax.ShapeDtypeStruct((Bp, Kp), jnp.float32),
        grid_spec=pltpu.PrefetchScalarGridSpec(
            num_scalar_prefetch=0,
            grid=(Bp // TB,),
            in_specs=[
                # x per batch tile.  (If DMA-latency bound at large TB, try
                # pipeline_mode=pl.Buffered(3) here and re-check the VMEM cap.)
                pl.BlockSpec((TB, S_pad, E), lambda b: (b, 0, 0)),
                pl.BlockSpec((W, E, Fp), lambda b: (0, 0, 0)),   # conv weight (resident)
                pl.BlockSpec((1, Fp), lambda b: (0, 0)),         # conv bias
                pl.BlockSpec((Fp, Kp), lambda b: (0, 0)),        # fc weight
                pl.BlockSpec((1, Kp), lambda b: (0, 0)),         # fc bias
            ],
            out_specs=pl.BlockSpec((TB, Kp), lambda b: (b, 0)),
        ),
        compiler_params=pltpu.CompilerParams(
            dimension_semantics=("parallel",),   # batch axis shards across v7x's 2 TCs
            vmem_limit_bytes=32 << 20,           # raise v5e's 16 MiB default scoped VMEM
        ),
    )(xp, wc, bc, wf, bf)

    return out[:B, :K]


def reference_forward(x, conv_weight, conv_bias, fc_weight, fc_bias):
    """Pure-JAX f32 reference matching the PyTorch forward semantics."""
    B, S, E = x.shape
    F, _, W = conv_weight.shape
    L = S - W + 1
    win = jnp.stack([x[:, w:w + L, :] for w in range(W)], axis=2)   # (B, L, W, E)
    y = jnp.einsum("blwe,few->blf", win, conv_weight) + conv_bias[None, None, :]
    y = jnp.maximum(y, 0.0)                                         # ReLU
    pooled = jnp.max(y, axis=1)                                     # (B, F)
    return pooled @ fc_weight.T + fc_bias                           # (B, K)


if __name__ == "__main__":
    # Small shapes consistent with the module: Conv1d(128 -> 16, kernel=3), Linear(16 -> 8)
    batch, seq_len = 16, 12
    embedding_dim, window_size, num_filters, k = 128, 3, 16, 8

    key = jax.random.PRNGKey(0)
    kx, kwc, kbc, kwf, kbf = jax.random.split(key, 5)

    x = jax.random.normal(kx, (batch, seq_len, embedding_dim), jnp.float32)
    conv_weight = jax.random.normal(
        kwc, (num_filters, embedding_dim, window_size), jnp.float32) * 0.1
    conv_bias = jax.random.normal(kbc, (num_filters,), jnp.float32) * 0.1
    fc_weight = jax.random.normal(kwf, (k, num_filters), jnp.float32) * 0.1
    fc_bias = jax.random.normal(kbf, (k,), jnp.float32) * 0.1

    fwd = jax.jit(convnet_for_text)
    out = fwd(x, conv_weight, conv_bias, fc_weight, fc_bias)
    out = jax.block_until_ready(out)

    ref = reference_forward(x, conv_weight, conv_bias, fc_weight, fc_bias)
    assert out.shape == (batch, k), out.shape
    # bf16 x / conv weights with f32 accumulation in the kernel vs. pure f32 reference.
    assert jnp.allclose(out, ref, atol=3e-2, rtol=3e-2), (
        float(jnp.max(jnp.abs(out - ref))))

    print("KERNEL_OK")
</pallas_src>

<mosaic_0001>
module attributes {stable_mosaic.version = 11 : i64} {
  func.func @kernel(%arg0: i32, %arg1: memref<16x18x128xbf16, #tpu.memory_space<vmem>>, %arg2: memref<3x128x128xbf16, #tpu.memory_space<vmem>>, %arg3: memref<1x128xf32, #tpu.memory_space<vmem>>, %arg4: memref<128x128xf32, #tpu.memory_space<vmem>>, %arg5: memref<1x128xf32, #tpu.memory_space<vmem>>, %arg6: memref<16x128xf32, #tpu.memory_space<vmem>>) attributes {dimension_semantics = [#tpu.dimension_semantics<parallel>], iteration_bounds = array<i64: 1>, scalar_prefetch = 0 : i64, scratch_operands = 0 : i64, tpu.core_type = #tpu.core_type<tc>, window_params = [{transform_indices = @transform_0, window_bounds = array<i64: 16, 18, 128>}, {pipeline_mode = #tpu.pipeline_mode<synchronous>, transform_indices = @transform_1, window_bounds = array<i64: 3, 128, 128>}, {pipeline_mode = #tpu.pipeline_mode<synchronous>, transform_indices = @transform_2, window_bounds = array<i64: 1, 128>}, {pipeline_mode = #tpu.pipeline_mode<synchronous>, transform_indices = @transform_3, window_bounds = array<i64: 128, 128>}, {pipeline_mode = #tpu.pipeline_mode<synchronous>, transform_indices = @transform_4, window_bounds = array<i64: 1, 128>}, {transform_indices = @transform_5, window_bounds = array<i64: 16, 128>}]} {
    %c0 = arith.constant 0 : index
    %c0_0 = arith.constant 0 : index
    %c0_1 = arith.constant 0 : index
    %0 = vector.load %arg1[%c0, %c0_0, %c0_1] : memref<16x18x128xbf16, #tpu.memory_space<vmem>>, vector<16x18x128xbf16>
    %1 = vector.extract_strided_slice %0 {offsets = [0, 0, 0], sizes = [16, 16, 128], strides = [1, 1, 1]} : vector<16x18x128xbf16> to vector<16x16x128xbf16>
    %2 = vector.shape_cast %1 : vector<16x16x128xbf16> to vector<256x128xbf16>
    %c0_2 = arith.constant 0 : index
    %c0_3 = arith.constant 0 : index
    %c0_4 = arith.constant 0 : index
    %3 = vector.load %arg2[%c0_2, %c0_3, %c0_4] : memref<3x128x128xbf16, #tpu.memory_space<vmem>>, vector<1x128x128xbf16>
    %4 = vector.shape_cast %3 : vector<1x128x128xbf16> to vector<128x128xbf16>
    %cst = arith.constant dense<0.000000e+00> : vector<256x128xf32>
    %5 = tpu.matmul %2, %4, %cst {dimension_numbers = #tpu.dot_dimension_numbers<[1], [0], [0], [1], [0, 0, 1, 1], [], []>} : vector<256x128xbf16>, vector<128x128xbf16>, vector<256x128xf32> -> vector<256x128xf32>
    %6 = vector.extract_strided_slice %0 {offsets = [0, 1, 0], sizes = [16, 16, 128], strides = [1, 1, 1]} : vector<16x18x128xbf16> to vector<16x16x128xbf16>
    %7 = vector.shape_cast %6 : vector<16x16x128xbf16> to vector<256x128xbf16>
    %c1 = arith.constant 1 : index
    %c0_5 = arith.constant 0 : index
    %c0_6 = arith.constant 0 : index
    %8 = vector.load %arg2[%c1, %c0_5, %c0_6] : memref<3x128x128xbf16, #tpu.memory_space<vmem>>, vector<1x128x128xbf16>
    %9 = vector.shape_cast %8 : vector<1x128x128xbf16> to vector<128x128xbf16>
    %cst_7 = arith.constant dense<0.000000e+00> : vector<256x128xf32>
    %10 = tpu.matmul %7, %9, %cst_7 {dimension_numbers = #tpu.dot_dimension_numbers<[1], [0], [0], [1], [0, 0, 1, 1], [], []>} : vector<256x128xbf16>, vector<128x128xbf16>, vector<256x128xf32> -> vector<256x128xf32>
    %11 = arith.addf %5, %10 : vector<256x128xf32>
    %12 = vector.extract_strided_slice %0 {offsets = [0, 2, 0], sizes = [16, 16, 128], strides = [1, 1, 1]} : vector<16x18x128xbf16> to vector<16x16x128xbf16>
    %13 = vector.shape_cast %12 : vector<16x16x128xbf16> to vector<256x128xbf16>
    %c2 = arith.constant 2 : index
    %c0_8 = arith.constant 0 : index
    %c0_9 = arith.constant 0 : index
    %14 = vector.load %arg2[%c2, %c0_8, %c0_9] : memref<3x128x128xbf16, #tpu.memory_space<vmem>>, vector<1x128x128xbf16>
    %15 = vector.shape_cast %14 : vector<1x128x128xbf16> to vector<128x128xbf16>
    %cst_10 = arith.constant dense<0.000000e+00> : vector<256x128xf32>
    %16 = tpu.matmul %13, %15, %cst_10 {dimension_numbers = #tpu.dot_dimension_numbers<[1], [0], [0], [1], [0, 0, 1, 1], [], []>} : vector<256x128xbf16>, vector<128x128xbf16>, vector<256x128xf32> -> vector<256x128xf32>
    %17 = arith.addf %11, %16 : vector<256x128xf32>
    %c0_11 = arith.constant 0 : index
    %c0_12 = arith.constant 0 : index
    %18 = vector.load %arg3[%c0_11, %c0_12] : memref<1x128xf32, #tpu.memory_space<vmem>>, vector<1x128xf32>
    %19 = vector.broadcast %18 : vector<1x128xf32> to vector<256x128xf32>
    %20 = arith.addf %17, %19 : vector<256x128xf32>
    %cst_13 = arith.constant 0.000000e+00 : f32
    %21 = vector.broadcast %cst_13 : f32 to vector<256x128xf32>
    %22 = arith.maximumf %20, %21 : vector<256x128xf32>
    %23 = vector.shape_cast %22 : vector<256x128xf32> to vector<16x16x128xf32>
    %24 = vector.extract_strided_slice %23 {offsets = [0, 0, 0], sizes = [16, 10, 128], strides = [1, 1, 1]} : vector<16x16x128xf32> to vector<16x10x128xf32>
    %cst_14 = arith.constant dense<0xFF800000> : vector<16x128xf32>
    %25 = vector.multi_reduction <maximumf>, %24, %cst_14 [1] : vector<16x10x128xf32> to vector<16x128xf32>
    %c0_15 = arith.constant 0 : index
    %c0_16 = arith.constant 0 : index
    %26 = vector.load %arg4[%c0_15, %c0_16] : memref<128x128xf32, #tpu.memory_space<vmem>>, vector<128x128xf32>
    %cst_17 = arith.constant dense<0.000000e+00> : vector<16x128xf32>
    %27 = tpu.matmul %25, %26, %cst_17 {dimension_numbers = #tpu.dot_dimension_numbers<[1], [0], [0], [1], [0, 0, 1, 1], [], []>} : vector<16x128xf32>, vector<128x128xf32>, vector<16x128xf32> -> vector<16x128xf32>
    %c0_18 = arith.constant 0 : index
    %c0_19 = arith.constant 0 : index
    %28 = vector.load %arg5[%c0_18, %c0_19] : memref<1x128xf32, #tpu.memory_space<vmem>>, vector<1x128xf32>
    %29 = vector.broadcast %28 : vector<1x128xf32> to vector<16x128xf32>
    %30 = arith.addf %27, %29 : vector<16x128xf32>
    %c0_20 = arith.constant 0 : index
    %c0_21 = arith.constant 0 : index
    %31 = vector.load %arg6[%c0_20, %c0_21] : memref<16x128xf32, #tpu.memory_space<vmem>>, vector<16x128xf32>
    tpu.vector_store %arg6[%c0_20, %c0_21], %30 {strides = array<i32>} : memref<16x128xf32, #tpu.memory_space<vmem>>, vector<16x128xf32>,
    return
  }
  func.func @transform_0(%arg0: i32) -> (i32, i32, i32) {
    %c0_i32 = arith.constant 0 : i32
    %c0_i32_0 = arith.constant 0 : i32
    %c0_i32_1 = arith.constant 0 : i32
    return %arg0, %c0_i32, %c0_i32_0 : i32, i32, i32
  }
  func.func @transform_1(%arg0: i32) -> (i32, i32, i32) {
    %c0_i32 = arith.constant 0 : i32
    %c0_i32_0 = arith.constant 0 : i32
    %c0_i32_1 = arith.constant 0 : i32
    %c0_i32_2 = arith.constant 0 : i32
    return %c0_i32, %c0_i32_0, %c0_i32_1 : i32, i32, i32
  }
  func.func @transform_2(%arg0: i32) -> (i32, i32) {
    %c0_i32 = arith.constant 0 : i32
    %c0_i32_0 = arith.constant 0 : i32
    %c0_i32_1 = arith.constant 0 : i32
    return %c0_i32, %c0_i32_0 : i32, i32
  }
  func.func @transform_3(%arg0: i32) -> (i32, i32) {
    %c0_i32 = arith.constant 0 : i32
    %c0_i32_0 = arith.constant 0 : i32
    %c0_i32_1 = arith.constant 0 : i32
    return %c0_i32, %c0_i32_0 : i32, i32
  }
  func.func @transform_4(%arg0: i32) -> (i32, i32) {
    %c0_i32 = arith.constant 0 : i32
    %c0_i32_0 = arith.constant 0 : i32
    %c0_i32_1 = arith.constant 0 : i32
    return %c0_i32, %c0_i32_0 : i32, i32
  }
  func.func @transform_5(%arg0: i32) -> (i32, i32) {
    %c0_i32 = arith.constant 0 : i32
    %c0_i32_0 = arith.constant 0 : i32
    return %arg0, %c0_i32 : i32, i32
  }
}

</mosaic_0001>

<llo_original>
// kernel: convnet_for_text.1
$region0: #{convnet_for_text.1}
  #allocation0 [shape = 'u32[]', space=smem, size = 0x4, offset = 0x4, fixed_abs, tag = 'smem constant byte address 0x4 - core index']
  #allocation1 [shape = 'u32[72,128]{1,0:T(1,128)}', space=vmem, size = 0x9000, scoped, tag = 'internal scratch']
  %s0 = inlined_call_operand.vmem [shape: bf16[16,18,128], index: 0, kind: input, shape index: {}]
  %s1 = inlined_call_operand.vmem [shape: bf16[3,128,128], index: 1, kind: input, shape index: {}]
  %s2 = inlined_call_operand.vmem [shape: f32[1,128], index: 2, kind: input, shape index: {}]
  %s3 = inlined_call_operand.vmem [shape: f32[128,128], index: 3, kind: input, shape index: {}]
  %s4 = inlined_call_operand.vmem [shape: f32[1,128], index: 4, kind: input, shape index: {}]
  %s5 = inlined_call_operand.vmem [shape: f32[16,128], index: 5, kind: output, shape index: {}]
  %s6 = sld [smem:[#allocation0]]
  $region30: #{convnet_for_text.1} parent=0
    _
  %s8 = ssub.s32 1, %s6
  %s9 = scalar_select 0, %s8, %s6
  // Predicated region
  $region2: #{convnet_for_text.1} parent=0 // pred_check
    _
  $region3: #{convnet_for_text.1} parent=0 // pred_check_branch
    %11 = sbr.rel (0) target = $region5
  $region4: #{convnet_for_text.1} parent=0 // pred_region
    _
  $region5: #{convnet_for_text.1} parent=0 // pred_fallthru
    _
  // Predicated region
  $region6: #{convnet_for_text.1} parent=0 // pred_check
    _
  $region7: #{convnet_for_text.1} parent=0 // pred_check_branch
    %13 = sbr.rel (0) target = $region9
  $region8: #{convnet_for_text.1} parent=0 // pred_region
    _
  $region9: #{convnet_for_text.1} parent=0 // pred_fallthru
    _
  // Predicated region
  $region10: #{convnet_for_text.1} parent=0 // pred_check
    _
  $region11: #{convnet_for_text.1} parent=0 // pred_check_branch
    %15 = sbr.rel (0) target = $region13
  $region12: #{convnet_for_text.1} parent=0 // pred_region
    _
  $region13: #{convnet_for_text.1} parent=0 // pred_fallthru
    _
  // Predicated region
  $region14: #{convnet_for_text.1} parent=0 // pred_check
    _
  $region15: #{convnet_for_text.1} parent=0 // pred_check_branch
    %17 = sbr.rel (0) target = $region17
  $region16: #{convnet_for_text.1} parent=0 // pred_region
    _
  $region17: #{convnet_for_text.1} parent=0 // pred_fallthru
    _
  // Predicated region
  $region18: #{convnet_for_text.1} parent=0 // pred_check
    _
  $region19: #{convnet_for_text.1} parent=0 // pred_check_branch
    %19 = sbr.rel (0) target = $region21
  $region20: #{convnet_for_text.1} parent=0 // pred_region
    _
  $region21: #{convnet_for_text.1} parent=0 // pred_fallthru
    _
  %v20 = vld [vmem:[%s0] sm:$0xf]
  %v21 = vld [vmem:[%s0 + $0x4] sm:$0xf]
  %v22 = vld [vmem:[%s0 + $0x8] sm:$0x1]
  %v23 = vld [vmem:[%s0 + $0xc] sm:$0xf]
  %v24 = vld [vmem:[%s0 + $0x10] sm:$0xf]
  %v25 = vld [vmem:[%s0 + $0x14] sm:$0x1]
  %v26 = vld [vmem:[%s0 + $0x18] sm:$0xf]
  %v27 = vld [vmem:[%s0 + $0x1c] sm:$0xf]
  %v28 = vld [vmem:[%s0 + $0x20] sm:$0x1]
  %v29 = vld [vmem:[%s0 + $0x24] sm:$0xf]
  %v30 = vld [vmem:[%s0 + $0x28] sm:$0xf]
  %v31 = vld [vmem:[%s0 + $0x2c] sm:$0x1]
  %v32 = vld [vmem:[%s0 + $0x30] sm:$0xf]
  %v33 = vld [vmem:[%s0 + $0x34] sm:$0xf]
  %v34 = vld [vmem:[%s0 + $0x38] sm:$0x1]
  %v35 = vld [vmem:[%s0 + $0x3c] sm:$0xf]
  %v36 = vld [vmem:[%s0 + $0x40] sm:$0xf]
  %v37 = vld [vmem:[%s0 + $0x44] sm:$0x1]
  %v38 = vld [vmem:[%s0 + $0x48] sm:$0xf]
  %v39 = vld [vmem:[%s0 + $0x4c] sm:$0xf]
  %v40 = vld [vmem:[%s0 + $0x50] sm:$0x1]
  %v41 = vld [vmem:[%s0 + $0x54] sm:$0xf]
  %v42 = vld [vmem:[%s0 + $0x58] sm:$0xf]
  %v43 = vld [vmem:[%s0 + $0x5c] sm:$0x1]
  %v44 = vld [vmem:[%s0 + $0x60] sm:$0xf]
  %v45 = vld [vmem:[%s0 + $0x64] sm:$0xf]
  %v46 = vld [vmem:[%s0 + $0x68] sm:$0x1]
  %v47 = vld [vmem:[%s0 + $0x6c] sm:$0xf]
  %v48 = vld [vmem:[%s0 + $0x70] sm:$0xf]
  %v49 = vld [vmem:[%s0 + $0x74] sm:$0x1]
  %v50 = vld [vmem:[%s0 + $0x78] sm:$0xf]
  %v51 = vld [vmem:[%s0 + $0x7c] sm:$0xf]
  %v52 = vld [vmem:[%s0 + $0x80] sm:$0x1]
  %v53 = vld [vmem:[%s0 + $0x84] sm:$0xf]
  %v54 = vld [vmem:[%s0 + $0x88] sm:$0xf]
  %v55 = vld [vmem:[%s0 + $0x8c] sm:$0x1]
  %v56 = vld [vmem:[%s0 + $0x90] sm:$0xf]
  %v57 = vld [vmem:[%s0 + $0x94] sm:$0xf]
  %v58 = vld [vmem:[%s0 + $0x98] sm:$0x1]
  %v59 = vld [vmem:[%s0 + $0x9c] sm:$0xf]
  %v60 = vld [vmem:[%s0 + $0xa0] sm:$0xf]
  %v61 = vld [vmem:[%s0 + $0xa4] sm:$0x1]
  %v62 = vld [vmem:[%s0 + $0xa8] sm:$0xf]
  %v63 = vld [vmem:[%s0 + $0xac] sm:$0xf]
  %v64 = vld [vmem:[%s0 + $0xb0] sm:$0x1]
  %v65 = vld [vmem:[%s0 + $0xb4] sm:$0xf]
  %v66 = vld [vmem:[%s0 + $0xb8] sm:$0xf]
  %v67 = vld [vmem:[%s0 + $0xbc] sm:$0x1]
  %v68 = vld [vmem:[%s1] sm:$0xf]
  %v69 = vld [vmem:[%s1 + $0x4] sm:$0xf]
  %v70 = vld [vmem:[%s1 + $0x8] sm:$0xf]
  %v71 = vld [vmem:[%s1 + $0xc] sm:$0xf]
  %v72 = vld [vmem:[%s1 + $0x10] sm:$0xf]
  %v73 = vld [vmem:[%s1 + $0x14] sm:$0xf]
  %v74 = vld [vmem:[%s1 + $0x18] sm:$0xf]
  %v75 = vld [vmem:[%s1 + $0x1c] sm:$0xf]
  %v76 = vld [vmem:[%s1 + $0x20] sm:$0xf]
  %v77 = vld [vmem:[%s1 + $0x24] sm:$0xf]
  %v78 = vld [vmem:[%s1 + $0x28] sm:$0xf]
  %v79 = vld [vmem:[%s1 + $0x2c] sm:$0xf]
  %v80 = vld [vmem:[%s1 + $0x30] sm:$0xf]
  %v81 = vld [vmem:[%s1 + $0x34] sm:$0xf]
  %v82 = vld [vmem:[%s1 + $0x38] sm:$0xf]
  %v83 = vld [vmem:[%s1 + $0x3c] sm:$0xf]
  %vm84 = vsmask.f32 3328
  %vm85 = vsmask.f32 7440
  %vm86 = vmor %vm84, %vm85
  %v88 = vshrl.u32 %v20, 16
  %v90 = vrot.slane %v88, 4
  %v91 = vshll.u32 %v20, 16
  %v93 = vrot.slane %v91, 5
  %v94 = vor.u32 %v90, %v93
  %v95 = vrot.slane %v94, 4
  %v97 = vshll.u32 %v21, 16
  %v99 = vrot.slane %v97, 5
  %v100 = vsel %vm86, %v95, %v99
  %v101 = vshrl.u32 %v21, 16
  %v103 = vrot.slane %v101, 4
  %v104 = vor.u32 %v103, %v99
  %v105 = vrot.slane %v104, 4
  %v107 = vshll.u32 %v22, 16
  %v109 = vrot.slane %v107, 5
  %v110 = vsel %vm86, %v105, %v109
  %v112 = vshrl.u32 %v23, 16
  %v114 = vrot.slane %v112, 4
  %v115 = vshll.u32 %v23, 16
  %v117 = vrot.slane %v115, 5
  %v118 = vor.u32 %v114, %v117
  %v119 = vrot.slane %v118, 4
  %v121 = vshll.u32 %v24, 16
  %v123 = vrot.slane %v121, 5
  %v124 = vsel %vm86, %v119, %v123
  %v125 = vshrl.u32 %v24, 16
  %v127 = vrot.slane %v125, 4
  %v128 = vor.u32 %v127, %v123
  %v129 = vrot.slane %v128, 4
  %v131 = vshll.u32 %v25, 16
  %v133 = vrot.slane %v131, 5
  %v134 = vsel %vm86, %v129, %v133
  %v136 = vshrl.u32 %v26, 16
  %v138 = vrot.slane %v136, 4
  %v139 = vshll.u32 %v26, 16
  %v141 = vrot.slane %v139, 5
  %v142 = vor.u32 %v138, %v141
  %v143 = vrot.slane %v142, 4
  %v145 = vshll.u32 %v27, 16
  %v147 = vrot.slane %v145, 5
  %v148 = vsel %vm86, %v143, %v147
  %v149 = vshrl.u32 %v27, 16
  %v151 = vrot.slane %v149, 4
  %v152 = vor.u32 %v151, %v147
  %v153 = vrot.slane %v152, 4
  %v155 = vshll.u32 %v28, 16
  %v157 = vrot.slane %v155, 5
  %v158 = vsel %vm86, %v153, %v157
  %v160 = vshrl.u32 %v29, 16
  %v162 = vrot.slane %v160, 4
  %v163 = vshll.u32 %v29, 16
  %v165 = vrot.slane %v163, 5
  %v166 = vor.u32 %v162, %v165
  %v167 = vrot.slane %v166, 4
  %v169 = vshll.u32 %v30, 16
  %v171 = vrot.slane %v169, 5
  %v172 = vsel %vm86, %v167, %v171
  %v173 = vshrl.u32 %v30, 16
  %v175 = vrot.slane %v173, 4
  %v176 = vor.u32 %v175, %v171
  %v177 = vrot.slane %v176, 4
  %v179 = vshll.u32 %v31, 16
  %v181 = vrot.slane %v179, 5
  %v182 = vsel %vm86, %v177, %v181
  %v184 = vshrl.u32 %v32, 16
  %v186 = vrot.slane %v184, 4
  %v187 = vshll.u32 %v32, 16
  %v189 = vrot.slane %v187, 5
  %v190 = vor.u32 %v186, %v189
  %v191 = vrot.slane %v190, 4
  %v193 = vshll.u32 %v33, 16
  %v195 = vrot.slane %v193, 5
  %v196 = vsel %vm86, %v191, %v195
  %v197 = vshrl.u32 %v33, 16
  %v199 = vrot.slane %v197, 4
  %v200 = vor.u32 %v199, %v195
  %v201 = vrot.slane %v200, 4
  %v203 = vshll.u32 %v34, 16
  %v205 = vrot.slane %v203, 5
  %v206 = vsel %vm86, %v201, %v205
  %v208 = vshrl.u32 %v35, 16
  %v210 = vrot.slane %v208, 4
  %v211 = vshll.u32 %v35, 16
  %v213 = vrot.slane %v211, 5
  %v214 = vor.u32 %v210, %v213
  %v215 = vrot.slane %v214, 4
  %v217 = vshll.u32 %v36, 16
  %v219 = vrot.slane %v217, 5
  %v220 = vsel %vm86, %v215, %v219
  %v221 = vshrl.u32 %v36, 16
  %v223 = vrot.slane %v221, 4
  %v224 = vor.u32 %v223, %v219
  %v225 = vrot.slane %v224, 4
  %v227 = vshll.u32 %v37, 16
  %v229 = vrot.slane %v227, 5
  %v230 = vsel %vm86, %v225, %v229
  %v232 = vshrl.u32 %v38, 16
  %v234 = vrot.slane %v232, 4
  %v235 = vshll.u32 %v38, 16
  %v237 = vrot.slane %v235, 5
  %v238 = vor.u32 %v234, %v237
  %v239 = vrot.slane %v238, 4
  %v241 = vshll.u32 %v39, 16
  %v243 = vrot.slane %v241, 5
  %v244 = vsel %vm86, %v239, %v243
  %v245 = vshrl.u32 %v39, 16
  %v247 = vrot.slane %v245, 4
  %v248 = vor.u32 %v247, %v243
  %v249 = vrot.slane %v248, 4
  %v251 = vshll.u32 %v40, 16
  %v253 = vrot.slane %v251, 5
  %v254 = vsel %vm86, %v249, %v253
  %v256 = vshrl.u32 %v41, 16
  %v258 = vrot.slane %v256, 4
  %v259 = vshll.u32 %v41, 16
  %v261 = vrot.slane %v259, 5
  %v262 = vor.u32 %v258, %v261
  %v263 = vrot.slane %v262, 4
  %v265 = vshll.u32 %v42, 16
  %v267 = vrot.slane %v265, 5
  %v268 = vsel %vm86, %v263, %v267
  %v269 = vshrl.u32 %v42, 16
  %v271 = vrot.slane %v269, 4
  %v272 = vor.u32 %v271, %v267
  %v273 = vrot.slane %v272, 4
  %v275 = vshll.u32 %v43, 16
  %v277 = vrot.slane %v275, 5
  %v278 = vsel %vm86, %v273, %v277
  %v280 = vshrl.u32 %v44, 16
  %v282 = vrot.slane %v280, 4
  %v283 = vshll.u32 %v44, 16
  %v285 = vrot.slane %v283, 5
  %v286 = vor.u32 %v282, %v285
  %v287 = vrot.slane %v286, 4
  %v289 = vshll.u32 %v45, 16
  %v291 = vrot.slane %v289, 5
  %v292 = vsel %vm86, %v287, %v291
  %v293 = vshrl.u32 %v45, 16
  %v295 = vrot.slane %v293, 4
  %v296 = vor.u32 %v295, %v291
  %v297 = vrot.slane %v296, 4
  %v299 = vshll.u32 %v46, 16
  %v301 = vrot.slane %v299, 5
  %v302 = vsel %vm86, %v297, %v301
  %v304 = vshrl.u32 %v47, 16
  %v306 = vrot.slane %v304, 4
  %v307 = vshll.u32 %v47, 16
  %v309 = vrot.slane %v307, 5
  %v310 = vor.u32 %v306, %v309
  %v311 = vrot.slane %v310, 4
  %v313 = vshll.u32 %v48, 16
  %v315 = vrot.slane %v313, 5
  %v316 = vsel %vm86, %v311, %v315
  %v317 = vshrl.u32 %v48, 16
  %v319 = vrot.slane %v317, 4
  %v320 = vor.u32 %v319, %v315
  %v321 = vrot.slane %v320, 4
  %v323 = vshll.u32 %v49, 16
  %v325 = vrot.slane %v323, 5
  %v326 = vsel %vm86, %v321, %v325
  %v328 = vshrl.u32 %v50, 16
  %v330 = vrot.slane %v328, 4
  %v331 = vshll.u32 %v50, 16
  %v333 = vrot.slane %v331, 5
  %v334 = vor.u32 %v330, %v333
  %v335 = vrot.slane %v334, 4
  %v337 = vshll.u32 %v51, 16
  %v339 = vrot.slane %v337, 5
  %v340 = vsel %vm86, %v335, %v339
  %v341 = vshrl.u32 %v51, 16
  %v343 = vrot.slane %v341, 4
  %v344 = vor.u32 %v343, %v339
  %v345 = vrot.slane %v344, 4
  %v347 = vshll.u32 %v52, 16
  %v349 = vrot.slane %v347, 5
  %v350 = vsel %vm86, %v345, %v349
  %v352 = vshrl.u32 %v53, 16
  %v354 = vrot.slane %v352, 4
  %v355 = vshll.u32 %v53, 16
  %v357 = vrot.slane %v355, 5
  %v358 = vor.u32 %v354, %v357
  %v359 = vrot.slane %v358, 4
  %v361 = vshll.u32 %v54, 16
  %v363 = vrot.slane %v361, 5
  %v364 = vsel %vm86, %v359, %v363
  %v365 = vshrl.u32 %v54, 16
  %v367 = vrot.slane %v365, 4
  %v368 = vor.u32 %v367, %v363
  %v369 = vrot.slane %v368, 4
  %v371 = vshll.u32 %v55, 16
  %v373 = vrot.slane %v371, 5
  %v374 = vsel %vm86, %v369, %v373
  %v376 = vshrl.u32 %v56, 16
  %v378 = vrot.slane %v376, 4
  %v379 = vshll.u32 %v56, 16
  %v381 = vrot.slane %v379, 5
  %v382 = vor.u32 %v378, %v381
  %v383 = vrot.slane %v382, 4
  %v385 = vshll.u32 %v57, 16
  %v387 = vrot.slane %v385, 5
  %v388 = vsel %vm86, %v383, %v387
  %v389 = vshrl.u32 %v57, 16
  %v391 = vrot.slane %v389, 4
  %v392 = vor.u32 %v391, %v387
  %v393 = vrot.slane %v392, 4
  %v395 = vshll.u32 %v58, 16
  %v397 = vrot.slane %v395, 5
  %v398 = vsel %vm86, %v393, %v397
  %v400 = vshrl.u32 %v59, 16
  %v402 = vrot.slane %v400, 4
  %v403 = vshll.u32 %v59, 16
  %v405 = vrot.slane %v403, 5
  %v406 = vor.u32 %v402, %v405
  %v407 = vrot.slane %v406, 4
  %v409 = vshll.u32 %v60, 16
  %v411 = vrot.slane %v409, 5
  %v412 = vsel %vm86, %v407, %v411
  %v413 = vshrl.u32 %v60, 16
  %v415 = vrot.slane %v413, 4
  %v416 = vor.u32 %v415, %v411
  %v417 = vrot.slane %v416, 4
  %v419 = vshll.u32 %v61, 16
  %v421 = vrot.slane %v419, 5
  %v422 = vsel %vm86, %v417, %v421
  %v424 = vshrl.u32 %v62, 16
  %v426 = vrot.slane %v424, 4
  %v427 = vshll.u32 %v62, 16
  %v429 = vrot.slane %v427, 5
  %v430 = vor.u32 %v426, %v429
  %v431 = vrot.slane %v430, 4
  %v433 = vshll.u32 %v63, 16
  %v435 = vrot.slane %v433, 5
  %v436 = vsel %vm86, %v431, %v435
  %v437 = vshrl.u32 %v63, 16
  %v439 = vrot.slane %v437, 4
  %v440 = vor.u32 %v439, %v435
  %v441 = vrot.slane %v440, 4
  %v443 = vshll.u32 %v64, 16
  %v445 = vrot.slane %v443, 5
  %v446 = vsel %vm86, %v441, %v445
  %v448 = vshrl.u32 %v65, 16
  %v450 = vrot.slane %v448, 4
  %v451 = vshll.u32 %v65, 16
  %v453 = vrot.slane %v451, 5
  %v454 = vor.u32 %v450, %v453
  %v455 = vrot.slane %v454, 4
  %v457 = vshll.u32 %v66, 16
  %v459 = vrot.slane %v457, 5
  %v460 = vsel %vm86, %v455, %v459
  %v461 = vshrl.u32 %v66, 16
  %v463 = vrot.slane %v461, 4
  %v464 = vor.u32 %v463, %v459
  %v465 = vrot.slane %v464, 4
  %v467 = vshll.u32 %v67, 16
  %v469 = vrot.slane %v467, 5
  %v470 = vsel %vm86, %v465, %v469
  %s471 = scalar_lea.vmem %s1, 64
  %v472 = vld [vmem:[%s471] sm:$0xf]
  %v473 = vld [vmem:[%s471 + $0x4] sm:$0xf]
  %v474 = vld [vmem:[%s471 + $0x8] sm:$0xf]
  %v475 = vld [vmem:[%s471 + $0xc] sm:$0xf]
  %v476 = vld [vmem:[%s471 + $0x10] sm:$0xf]
  %v477 = vld [vmem:[%s471 + $0x14] sm:$0xf]
  %v478 = vld [vmem:[%s471 + $0x18] sm:$0xf]
  %v479 = vld [vmem:[%s471 + $0x1c] sm:$0xf]
  %v480 = vld [vmem:[%s471 + $0x20] sm:$0xf]
  %v481 = vld [vmem:[%s471 + $0x24] sm:$0xf]
  %v482 = vld [vmem:[%s471 + $0x28] sm:$0xf]
  %v483 = vld [vmem:[%s471 + $0x2c] sm:$0xf]
  %v484 = vld [vmem:[%s471 + $0x30] sm:$0xf]
  %v485 = vld [vmem:[%s471 + $0x34] sm:$0xf]
  %v486 = vld [vmem:[%s471 + $0x38] sm:$0xf]
  %v487 = vld [vmem:[%s471 + $0x3c] sm:$0xf]
  %v488 = vunpack.c.l.b16 %v100
  %v489 = vunpack.c.l.b16 %v110
  %v490 = vunpack.c.l.b16 %v124
  %v491 = vunpack.c.l.b16 %v134
  %v492 = vunpack.c.l.b16 %v148
  %v493 = vunpack.c.l.b16 %v158
  %v494 = vunpack.c.l.b16 %v172
  %v495 = vunpack.c.l.b16 %v182
  %v496 = vunpack.c.l.b16 %v196
  %v497 = vunpack.c.l.b16 %v206
  %v498 = vunpack.c.l.b16 %v220
  %v499 = vunpack.c.l.b16 %v230
  %v500 = vunpack.c.l.b16 %v244
  %v501 = vunpack.c.l.b16 %v254
  %v502 = vunpack.c.l.b16 %v268
  %v503 = vunpack.c.l.b16 %v278
  %v504 = vunpack.c.l.b16 %v292
  %v505 = vunpack.c.l.b16 %v302
  %v506 = vunpack.c.l.b16 %v316
  %v507 = vunpack.c.l.b16 %v326
  %v508 = vunpack.c.l.b16 %v340
  %v509 = vunpack.c.l.b16 %v350
  %v510 = vunpack.c.l.b16 %v364
  %v511 = vunpack.c.l.b16 %v374
  %v512 = vunpack.c.l.b16 %v388
  %v513 = vunpack.c.l.b16 %v398
  %v514 = vunpack.c.l.b16 %v412
  %v515 = vunpack.c.l.b16 %v422
  %v516 = vunpack.c.l.b16 %v436
  %v517 = vunpack.c.l.b16 %v446
  %v518 = vunpack.c.l.b16 %v460
  %v519 = vunpack.c.l.b16 %v470
  %v520 = vpack.c.b16 %v489, %v488
  %v521 = vpack.c.b16 %v491, %v490
  %v522 = vpack.c.b16 %v493, %v492
  %v523 = vpack.c.b16 %v495, %v494
  %v524 = vpack.c.b16 %v497, %v496
  %v525 = vpack.c.b16 %v499, %v498
  %v526 = vpack.c.b16 %v501, %v500
  %v527 = vpack.c.b16 %v503, %v502
  %v528 = vpack.c.b16 %v505, %v504
  %v529 = vpack.c.b16 %v507, %v506
  %v530 = vpack.c.b16 %v509, %v508
  %v531 = vpack.c.b16 %v511, %v510
  %v532 = vpack.c.b16 %v513, %v512
  %v533 = vpack.c.b16 %v515, %v514
  %v534 = vpack.c.b16 %v517, %v516
  %v535 = vpack.c.b16 %v519, %v518
  %v568 = vunpack.c.l.b16 %v472
  %v569 = vunpack.c.l.b16 %v473
  %v570 = vunpack.c.l.b16 %v474
  %v571 = vunpack.c.l.b16 %v475
  %v572 = vunpack.c.l.b16 %v476
  %v573 = vunpack.c.l.b16 %v477
  %v574 = vunpack.c.l.b16 %v478
  %v575 = vunpack.c.l.b16 %v479
  %v576 = vunpack.c.l.b16 %v480
  %v577 = vunpack.c.l.b16 %v481
  %v578 = vunpack.c.l.b16 %v482
  %v579 = vunpack.c.l.b16 %v483
  %v580 = vunpack.c.l.b16 %v484
  %v581 = vunpack.c.l.b16 %v485
  %v582 = vunpack.c.l.b16 %v486
  %v583 = vunpack.c.l.b16 %v487
  %v584 = vpack.c.b16 %v569, %v568
  %v585 = vpack.c.b16 %v571, %v570
  %v586 = vpack.c.b16 %v573, %v572
  %v587 = vpack.c.b16 %v575, %v574
  %v588 = vpack.c.b16 %v577, %v576
  %v589 = vpack.c.b16 %v579, %v578
  %v590 = vpack.c.b16 %v581, %v580
  %v591 = vpack.c.b16 %v583, %v582
  %600 = vmatpush.bf16.msra.mxu0 %v591
  %601 = vmatpush.bf16.msra.mxu0 %v590
  %602 = vmatpush.bf16.msra.mxu0 %v589
  %603 = vmatpush.bf16.msra.mxu0 %v588
  %604 = vmatpush.bf16.msra.mxu0 %v587
  %605 = vmatpush.bf16.msra.mxu0 %v586
  %606 = vmatpush.bf16.msra.mxu0 %v585
  %607 = vmatpush.bf16.msra.mxu0 %v584
  %608 = vmatmul.bf16.gmra.mxu0 %v520
  %v609 = vpop.f32.mrf.mxu0
  %v610 = vadd.f32 0.0, %v609
  %v611 = vpop.f32.mrf.mxu0
  %v612 = vadd.f32 0.0, %v611
  %613 = vmatmul.bf16.gmra.mxu0 %v521
  %v614 = vpop.f32.mrf.mxu0
  %v615 = vadd.f32 0.0, %v614
  %v616 = vpop.f32.mrf.mxu0
  %v617 = vadd.f32 0.0, %v616
  %618 = vmatmul.bf16.gmra.mxu0 %v522
  %v619 = vpop.f32.mrf.mxu0
  %v620 = vadd.f32 0.0, %v619
  %v621 = vpop.f32.mrf.mxu0
  %v622 = vadd.f32 0.0, %v621
  %623 = vmatmul.bf16.gmra.mxu0 %v523
  %v624 = vpop.f32.mrf.mxu0
  %v625 = vadd.f32 0.0, %v624
  %v626 = vpop.f32.mrf.mxu0
  %v627 = vadd.f32 0.0, %v626
  %628 = vmatmul.bf16.gmra.mxu0 %v524
  %v629 = vpop.f32.mrf.mxu0
  %v630 = vadd.f32 0.0, %v629
  %v631 = vpop.f32.mrf.mxu0
  %v632 = vadd.f32 0.0, %v631
  %633 = vmatmul.bf16.gmra.mxu0 %v525
  %v634 = vpop.f32.mrf.mxu0
  %v635 = vadd.f32 0.0, %v634
  %v636 = vpop.f32.mrf.mxu0
  %v637 = vadd.f32 0.0, %v636
  %638 = vmatmul.bf16.gmra.mxu0 %v526
  %v639 = vpop.f32.mrf.mxu0
  %v640 = vadd.f32 0.0, %v639
  %v641 = vpop.f32.mrf.mxu0
  %v642 = vadd.f32 0.0, %v641
  %643 = vmatmul.bf16.gmra.mxu0 %v527
  %v644 = vpop.f32.mrf.mxu0
  %v645 = vadd.f32 0.0, %v644
  %v646 = vpop.f32.mrf.mxu0
  %v647 = vadd.f32 0.0, %v646
  %648 = vmatmul.bf16.gmra.mxu0 %v528
  %v649 = vpop.f32.mrf.mxu0
  %v650 = vadd.f32 0.0, %v649
  %v651 = vpop.f32.mrf.mxu0
  %v652 = vadd.f32 0.0, %v651
  %653 = vmatmul.bf16.gmra.mxu0 %v529
  %v654 = vpop.f32.mrf.mxu0
  %v655 = vadd.f32 0.0, %v654
  %v656 = vpop.f32.mrf.mxu0
  %v657 = vadd.f32 0.0, %v656
  %658 = vmatmul.bf16.gmra.mxu0 %v530
  %v659 = vpop.f32.mrf.mxu0
  %v660 = vadd.f32 0.0, %v659
  %v661 = vpop.f32.mrf.mxu0
  %v662 = vadd.f32 0.0, %v661
  %663 = vmatmul.bf16.gmra.mxu0 %v531
  %v664 = vpop.f32.mrf.mxu0
  %v665 = vadd.f32 0.0, %v664
  %v666 = vpop.f32.mrf.mxu0
  %v667 = vadd.f32 0.0, %v666
  %668 = vmatmul.bf16.gmra.mxu0 %v532
  %v669 = vpop.f32.mrf.mxu0
  %v670 = vadd.f32 0.0, %v669
  %v671 = vpop.f32.mrf.mxu0
  %v672 = vadd.f32 0.0, %v671
  %673 = vmatmul.bf16.gmra.mxu0 %v533
  %v674 = vpop.f32.mrf.mxu0
  %v675 = vadd.f32 0.0, %v674
  %v676 = vpop.f32.mrf.mxu0
  %v677 = vadd.f32 0.0, %v676
  %678 = vmatmul.bf16.gmra.mxu0 %v534
  %v679 = vpop.f32.mrf.mxu0
  %v680 = vadd.f32 0.0, %v679
  %v681 = vpop.f32.mrf.mxu0
  %v682 = vadd.f32 0.0, %v681
  %683 = vmatmul.bf16.gmra.mxu0 %v535
  %v684 = vpop.f32.mrf.mxu0
  %v685 = vadd.f32 0.0, %v684
  %v686 = vpop.f32.mrf.mxu0
  %v687 = vadd.f32 0.0, %v686
  %688 = vdwg.mxu0
  %v721 = vunpack.c.l.b16 %v20
  %v722 = vunpack.c.l.b16 %v21
  %v723 = vunpack.c.l.b16 %v23
  %v724 = vunpack.c.l.b16 %v24
  %v725 = vunpack.c.l.b16 %v26
  %v726 = vunpack.c.l.b16 %v27
  %v727 = vunpack.c.l.b16 %v29
  %v728 = vunpack.c.l.b16 %v30
  %v729 = vunpack.c.l.b16 %v32
  %v730 = vunpack.c.l.b16 %v33
  %v731 = vunpack.c.l.b16 %v35
  %v732 = vunpack.c.l.b16 %v36
  %v733 = vunpack.c.l.b16 %v38
  %v734 = vunpack.c.l.b16 %v39
  %v735 = vunpack.c.l.b16 %v41
  %v736 = vunpack.c.l.b16 %v42
  %v737 = vunpack.c.l.b16 %v44
  %v738 = vunpack.c.l.b16 %v45
  %v739 = vunpack.c.l.b16 %v47
  %v740 = vunpack.c.l.b16 %v48
  %v741 = vunpack.c.l.b16 %v50
  %v742 = vunpack.c.l.b16 %v51
  %v743 = vunpack.c.l.b16 %v53
  %v744 = vunpack.c.l.b16 %v54
  %v745 = vunpack.c.l.b16 %v56
  %v746 = vunpack.c.l.b16 %v57
  %v747 = vunpack.c.l.b16 %v59
  %v748 = vunpack.c.l.b16 %v60
  %v749 = vunpack.c.l.b16 %v62
  %v750 = vunpack.c.l.b16 %v63
  %v751 = vunpack.c.l.b16 %v65
  %v752 = vunpack.c.l.b16 %v66
  %v753 = vpack.c.b16 %v722, %v721
  %v754 = vpack.c.b16 %v724, %v723
  %v755 = vpack.c.b16 %v726, %v725
  %v756 = vpack.c.b16 %v728, %v727
  %v757 = vpack.c.b16 %v730, %v729
  %v758 = vpack.c.b16 %v732, %v731
  %v759 = vpack.c.b16 %v734, %v733
  %v760 = vpack.c.b16 %v736, %v735
  %v761 = vpack.c.b16 %v738, %v737
  %v762 = vpack.c.b16 %v740, %v739
  %v763 = vpack.c.b16 %v742, %v741
  %v764 = vpack.c.b16 %v744, %v743
  %v765 = vpack.c.b16 %v746, %v745
  %v766 = vpack.c.b16 %v748, %v747
  %v767 = vpack.c.b16 %v750, %v749
  %v768 = vpack.c.b16 %v752, %v751
  %v801 = vunpack.c.l.b16 %v68
  %v802 = vunpack.c.l.b16 %v69
  %v803 = vunpack.c.l.b16 %v70
  %v804 = vunpack.c.l.b16 %v71
  %v805 = vunpack.c.l.b16 %v72
  %v806 = vunpack.c.l.b16 %v73
  %v807 = vunpack.c.l.b16 %v74
  %v808 = vunpack.c.l.b16 %v75
  %v809 = vunpack.c.l.b16 %v76
  %v810 = vunpack.c.l.b16 %v77
  %v811 = vunpack.c.l.b16 %v78
  %v812 = vunpack.c.l.b16 %v79
  %v813 = vunpack.c.l.b16 %v80
  %v814 = vunpack.c.l.b16 %v81
  %v815 = vunpack.c.l.b16 %v82
  %v816 = vunpack.c.l.b16 %v83
  %v817 = vpack.c.b16 %v802, %v801
  %v818 = vpack.c.b16 %v804, %v803
  %v819 = vpack.c.b16 %v806, %v805
  %v820 = vpack.c.b16 %v808, %v807
  %v821 = vpack.c.b16 %v810, %v809
  %v822 = vpack.c.b16 %v812, %v811
  %v823 = vpack.c.b16 %v814, %v813
  %v824 = vpack.c.b16 %v816, %v815
  %833 = vmatpush.bf16.msra.mxu0 %v824
  %834 = vmatpush.bf16.msra.mxu0 %v823
  %835 = vmatpush.bf16.msra.mxu0 %v822
  %836 = vmatpush.bf16.msra.mxu0 %v821
  %837 = vmatpush.bf16.msra.mxu0 %v820
  %838 = vmatpush.bf16.msra.mxu0 %v819
  %839 = vmatpush.bf16.msra.mxu0 %v818
  %840 = vmatpush.bf16.msra.mxu0 %v817
  %841 = vmatmul.bf16.gmra.mxu0 %v753
  %v842 = vpop.f32.mrf.mxu0
  %v843 = vadd.f32 %v610, %v842
  %v844 = vpop.f32.mrf.mxu0
  %v845 = vadd.f32 %v612, %v844
  %846 = vmatmul.bf16.gmra.mxu0 %v754
  %v847 = vpop.f32.mrf.mxu0
  %v848 = vadd.f32 %v615, %v847
  %v849 = vpop.f32.mrf.mxu0
  %v850 = vadd.f32 %v617, %v849
  %851 = vmatmul.bf16.gmra.mxu0 %v755
  %v852 = vpop.f32.mrf.mxu0
  %v853 = vadd.f32 %v620, %v852
  %v854 = vpop.f32.mrf.mxu0
  %v855 = vadd.f32 %v622, %v854
  %856 = vmatmul.bf16.gmra.mxu0 %v756
  %v857 = vpop.f32.mrf.mxu0
  %v858 = vadd.f32 %v625, %v857
  %v859 = vpop.f32.mrf.mxu0
  %v860 = vadd.f32 %v627, %v859
  %861 = vmatmul.bf16.gmra.mxu0 %v757
  %v862 = vpop.f32.mrf.mxu0
  %v863 = vadd.f32 %v630, %v862
  %v864 = vpop.f32.mrf.mxu0
  %v865 = vadd.f32 %v632, %v864
  %866 = vmatmul.bf16.gmra.mxu0 %v758
  %v867 = vpop.f32.mrf.mxu0
  %v868 = vadd.f32 %v635, %v867
  %v869 = vpop.f32.mrf.mxu0
  %v870 = vadd.f32 %v637, %v869
  %871 = vmatmul.bf16.gmra.mxu0 %v759
  %v872 = vpop.f32.mrf.mxu0
  %v873 = vadd.f32 %v640, %v872
  %v874 = vpop.f32.mrf.mxu0
  %v875 = vadd.f32 %v642, %v874
  %876 = vmatmul.bf16.gmra.mxu0 %v760
  %v877 = vpop.f32.mrf.mxu0
  %v878 = vadd.f32 %v645, %v877
  %v879 = vpop.f32.mrf.mxu0
  %v880 = vadd.f32 %v647, %v879
  %881 = vmatmul.bf16.gmra.mxu0 %v761
  %v882 = vpop.f32.mrf.mxu0
  %v883 = vadd.f32 %v650, %v882
  %v884 = vpop.f32.mrf.mxu0
  %v885 = vadd.f32 %v652, %v884
  %886 = vmatmul.bf16.gmra.mxu0 %v762
  %v887 = vpop.f32.mrf.mxu0
  %v888 = vadd.f32 %v655, %v887
  %v889 = vpop.f32.mrf.mxu0
  %v890 = vadd.f32 %v657, %v889
  %891 = vmatmul.bf16.gmra.mxu0 %v763
  %v892 = vpop.f32.mrf.mxu0
  %v893 = vadd.f32 %v660, %v892
  %v894 = vpop.f32.mrf.mxu0
  %v895 = vadd.f32 %v662, %v894
  %896 = vmatmul.bf16.gmra.mxu0 %v764
  %v897 = vpop.f32.mrf.mxu0
  %v898 = vadd.f32 %v665, %v897
  %v899 = vpop.f32.mrf.mxu0
  %v900 = vadd.f32 %v667, %v899
  %901 = vmatmul.bf16.gmra.mxu0 %v765
  %v902 = vpop.f32.mrf.mxu0
  %v903 = vadd.f32 %v670, %v902
  %v904 = vpop.f32.mrf.mxu0
  %v905 = vadd.f32 %v672, %v904
  %906 = vmatmul.bf16.gmra.mxu0 %v766
  %v907 = vpop.f32.mrf.mxu0
  %v908 = vadd.f32 %v675, %v907
  %v909 = vpop.f32.mrf.mxu0
  %v910 = vadd.f32 %v677, %v909
  %911 = vmatmul.bf16.gmra.mxu0 %v767
  %v912 = vpop.f32.mrf.mxu0
  %v913 = vadd.f32 %v680, %v912
  %v914 = vpop.f32.mrf.mxu0
  %v915 = vadd.f32 %v682, %v914
  %916 = vmatmul.bf16.gmra.mxu0 %v768
  %v917 = vpop.f32.mrf.mxu0
  %v918 = vadd.f32 %v685, %v917
  %v919 = vpop.f32.mrf.mxu0
  %v920 = vadd.f32 %v687, %v919
  %921 = vdwg.mxu0
  %vm938 = vcmask 1042432
  %vm939 = vcmask 1046532
  %vm940 = vmor %vm938, %vm939
  %v941 = vrot.slane %v20, 5
  %v942 = vrot.slane %v941, 4
  %v943 = vrot.slane %v21, 5
  %v944 = vsel %vm940, %v942, %v943
  %v945 = vrot.slane %v943, 4
  %v946 = vrot.slane %v22, 5
  %v947 = vsel %vm940, %v945, %v946
  %v948 = vrot.slane %v23, 5
  %v949 = vrot.slane %v948, 4
  %v950 = vrot.slane %v24, 5
  %v951 = vsel %vm940, %v949, %v950
  %v952 = vrot.slane %v950, 4
  %v953 = vrot.slane %v25, 5
  %v954 = vsel %vm940, %v952, %v953
  %v955 = vrot.slane %v26, 5
  %v956 = vrot.slane %v955, 4
  %v957 = vrot.slane %v27, 5
  %v958 = vsel %vm940, %v956, %v957
  %v959 = vrot.slane %v957, 4
  %v960 = vrot.slane %v28, 5
  %v961 = vsel %vm940, %v959, %v960
  %v962 = vrot.slane %v29, 5
  %v963 = vrot.slane %v962, 4
  %v964 = vrot.slane %v30, 5
  %v965 = vsel %vm940, %v963, %v964
  %v966 = vrot.slane %v964, 4
  %v967 = vrot.slane %v31, 5
  %v968 = vsel %vm940, %v966, %v967
  %v969 = vrot.slane %v32, 5
  %v970 = vrot.slane %v969, 4
  %v971 = vrot.slane %v33, 5
  %v972 = vsel %vm940, %v970, %v971
  %v973 = vrot.slane %v971, 4
  %v974 = vrot.slane %v34, 5
  %v975 = vsel %vm940, %v973, %v974
  %v976 = vrot.slane %v35, 5
  %v977 = vrot.slane %v976, 4
  %v978 = vrot.slane %v36, 5
  %v979 = vsel %vm940, %v977, %v978
  %v980 = vrot.slane %v978, 4
  %v981 = vrot.slane %v37, 5
  %v982 = vsel %vm940, %v980, %v981
  %v983 = vrot.slane %v38, 5
  %v984 = vrot.slane %v983, 4
  %v985 = vrot.slane %v39, 5
  %v986 = vsel %vm940, %v984, %v985
  %v987 = vrot.slane %v985, 4
  %v988 = vrot.slane %v40, 5
  %v989 = vsel %vm940, %v987, %v988
  %v990 = vrot.slane %v41, 5
  %v991 = vrot.slane %v990, 4
  %v992 = vrot.slane %v42, 5
  %v993 = vsel %vm940, %v991, %v992
  %v994 = vrot.slane %v992, 4
  %v995 = vrot.slane %v43, 5
  %v996 = vsel %vm940, %v994, %v995
  %v997 = vrot.slane %v44, 5
  %v998 = vrot.slane %v997, 4
  %v999 = vrot.slane %v45, 5
  %v1000 = vsel %vm940, %v998, %v999
  %v1001 = vrot.slane %v999, 4
  %v1002 = vrot.slane %v46, 5
  %v1003 = vsel %vm940, %v1001, %v1002
  %v1004 = vrot.slane %v47, 5
  %v1005 = vrot.slane %v1004, 4
  %v1006 = vrot.slane %v48, 5
  %v1007 = vsel %vm940, %v1005, %v1006
  %v1008 = vrot.slane %v1006, 4
  %v1009 = vrot.slane %v49, 5
  %v1010 = vsel %vm940, %v1008, %v1009
  %v1011 = vrot.slane %v50, 5
  %v1012 = vrot.slane %v1011, 4
  %v1013 = vrot.slane %v51, 5
  %v1014 = vsel %vm940, %v1012, %v1013
  %v1015 = vrot.slane %v1013, 4
  %v1016 = vrot.slane %v52, 5
  %v1017 = vsel %vm940, %v1015, %v1016
  %v1018 = vrot.slane %v53, 5
  %v1019 = vrot.slane %v1018, 4
  %v1020 = vrot.slane %v54, 5
  %v1021 = vsel %vm940, %v1019, %v1020
  %v1022 = vrot.slane %v1020, 4
  %v1023 = vrot.slane %v55, 5
  %v1024 = vsel %vm940, %v1022, %v1023
  %v1025 = vrot.slane %v56, 5
  %v1026 = vrot.slane %v1025, 4
  %v1027 = vrot.slane %v57, 5
  %v1028 = vsel %vm940, %v1026, %v1027
  %v1029 = vrot.slane %v1027, 4
  %v1030 = vrot.slane %v58, 5
  %v1031 = vsel %vm940, %v1029, %v1030
  %v1032 = vrot.slane %v59, 5
  %v1033 = vrot.slane %v1032, 4
  %v1034 = vrot.slane %v60, 5
  %v1035 = vsel %vm940, %v1033, %v1034
  %v1036 = vrot.slane %v1034, 4
  %v1037 = vrot.slane %v61, 5
  %v1038 = vsel %vm940, %v1036, %v1037
  %v1039 = vrot.slane %v62, 5
  %v1040 = vrot.slane %v1039, 4
  %v1041 = vrot.slane %v63, 5
  %v1042 = vsel %vm940, %v1040, %v1041
  %v1043 = vrot.slane %v1041, 4
  %v1044 = vrot.slane %v64, 5
  %v1045 = vsel %vm940, %v1043, %v1044
  %v1046 = vrot.slane %v65, 5
  %v1047 = vrot.slane %v1046, 4
  %v1048 = vrot.slane %v66, 5
  %v1049 = vsel %vm940, %v1047, %v1048
  %v1050 = vrot.slane %v1048, 4
  %v1051 = vrot.slane %v67, 5
  %v1052 = vsel %vm940, %v1050, %v1051
  %s1053 = scalar_lea.vmem %s1, 128
  %v1054 = vld [vmem:[%s1053] sm:$0xf]
  %v1055 = vld [vmem:[%s1053 + $0x4] sm:$0xf]
  %v1056 = vld [vmem:[%s1053 + $0x8] sm:$0xf]
  %v1057 = vld [vmem:[%s1053 + $0xc] sm:$0xf]
  %v1058 = vld [vmem:[%s1053 + $0x10] sm:$0xf]
  %v1059 = vld [vmem:[%s1053 + $0x14] sm:$0xf]
  %v1060 = vld [vmem:[%s1053 + $0x18] sm:$0xf]
  %v1061 = vld [vmem:[%s1053 + $0x1c] sm:$0xf]
  %v1062 = vld [vmem:[%s1053 + $0x20] sm:$0xf]
  %v1063 = vld [vmem:[%s1053 + $0x24] sm:$0xf]
  %v1064 = vld [vmem:[%s1053 + $0x28] sm:$0xf]
  %v1065 = vld [vmem:[%s1053 + $0x2c] sm:$0xf]
  %v1066 = vld [vmem:[%s1053 + $0x30] sm:$0xf]
  %v1067 = vld [vmem:[%s1053 + $0x34] sm:$0xf]
  %v1068 = vld [vmem:[%s1053 + $0x38] sm:$0xf]
  %v1069 = vld [vmem:[%s1053 + $0x3c] sm:$0xf]
  %v1070 = vunpack.c.l.b16 %v944
  %v1071 = vunpack.c.l.b16 %v947
  %v1072 = vunpack.c.l.b16 %v951
  %v1073 = vunpack.c.l.b16 %v954
  %v1074 = vunpack.c.l.b16 %v958
  %v1075 = vunpack.c.l.b16 %v961
  %v1076 = vunpack.c.l.b16 %v965
  %v1077 = vunpack.c.l.b16 %v968
  %v1078 = vunpack.c.l.b16 %v972
  %v1079 = vunpack.c.l.b16 %v975
  %v1080 = vunpack.c.l.b16 %v979
  %v1081 = vunpack.c.l.b16 %v982
  %v1082 = vunpack.c.l.b16 %v986
  %v1083 = vunpack.c.l.b16 %v989
  %v1084 = vunpack.c.l.b16 %v993
  %v1085 = vunpack.c.l.b16 %v996
  %v1086 = vunpack.c.l.b16 %v1000
  %v1087 = vunpack.c.l.b16 %v1003
  %v1088 = vunpack.c.l.b16 %v1007
  %v1089 = vunpack.c.l.b16 %v1010
  %v1090 = vunpack.c.l.b16 %v1014
  %v1091 = vunpack.c.l.b16 %v1017
  %v1092 = vunpack.c.l.b16 %v1021
  %v1093 = vunpack.c.l.b16 %v1024
  %v1094 = vunpack.c.l.b16 %v1028
  %v1095 = vunpack.c.l.b16 %v1031
  %v1096 = vunpack.c.l.b16 %v1035
  %v1097 = vunpack.c.l.b16 %v1038
  %v1098 = vunpack.c.l.b16 %v1042
  %v1099 = vunpack.c.l.b16 %v1045
  %v1100 = vunpack.c.l.b16 %v1049
  %v1101 = vunpack.c.l.b16 %v1052
  %v1102 = vpack.c.b16 %v1071, %v1070
  %v1103 = vpack.c.b16 %v1073, %v1072
  %v1104 = vpack.c.b16 %v1075, %v1074
  %v1105 = vpack.c.b16 %v1077, %v1076
  %v1106 = vpack.c.b16 %v1079, %v1078
  %v1107 = vpack.c.b16 %v1081, %v1080
  %v1108 = vpack.c.b16 %v1083, %v1082
  %v1109 = vpack.c.b16 %v1085, %v1084
  %v1110 = vpack.c.b16 %v1087, %v1086
  %v1111 = vpack.c.b16 %v1089, %v1088
  %v1112 = vpack.c.b16 %v1091, %v1090
  %v1113 = vpack.c.b16 %v1093, %v1092
  %v1114 = vpack.c.b16 %v1095, %v1094
  %v1115 = vpack.c.b16 %v1097, %v1096
  %v1116 = vpack.c.b16 %v1099, %v1098
  %v1117 = vpack.c.b16 %v1101, %v1100
  %v1150 = vunpack.c.l.b16 %v1054
  %v1151 = vunpack.c.l.b16 %v1055
  %v1152 = vunpack.c.l.b16 %v1056
  %v1153 = vunpack.c.l.b16 %v1057
  %v1154 = vunpack.c.l.b16 %v1058
  %v1155 = vunpack.c.l.b16 %v1059
  %v1156 = vunpack.c.l.b16 %v1060
  %v1157 = vunpack.c.l.b16 %v1061
  %v1158 = vunpack.c.l.b16 %v1062
  %v1159 = vunpack.c.l.b16 %v1063
  %v1160 = vunpack.c.l.b16 %v1064
  %v1161 = vunpack.c.l.b16 %v1065
  %v1162 = vunpack.c.l.b16 %v1066
  %v1163 = vunpack.c.l.b16 %v1067
  %v1164 = vunpack.c.l.b16 %v1068
  %v1165 = vunpack.c.l.b16 %v1069
  %v1166 = vpack.c.b16 %v1151, %v1150
  %v1167 = vpack.c.b16 %v1153, %v1152
  %v1168 = vpack.c.b16 %v1155, %v1154
  %v1169 = vpack.c.b16 %v1157, %v1156
  %v1170 = vpack.c.b16 %v1159, %v1158
  %v1171 = vpack.c.b16 %v1161, %v1160
  %v1172 = vpack.c.b16 %v1163, %v1162
  %v1173 = vpack.c.b16 %v1165, %v1164
  %1182 = vmatpush.bf16.msra.mxu0 %v1173
  %1183 = vmatpush.bf16.msra.mxu0 %v1172
  %1184 = vmatpush.bf16.msra.mxu0 %v1171
  %1185 = vmatpush.bf16.msra.mxu0 %v1170
  %1186 = vmatpush.bf16.msra.mxu0 %v1169
  %1187 = vmatpush.bf16.msra.mxu0 %v1168
  %1188 = vmatpush.bf16.msra.mxu0 %v1167
  %1189 = vmatpush.bf16.msra.mxu0 %v1166
  %1190 = vmatmul.bf16.gmra.mxu0 %v1102
  %v1191 = vpop.f32.mrf.mxu0
  %v1192 = vadd.f32 0.0, %v1191
  %v1193 = vpop.f32.mrf.mxu0
  %v1194 = vadd.f32 0.0, %v1193
  %1195 = vmatmul.bf16.gmra.mxu0 %v1103
  %v1196 = vpop.f32.mrf.mxu0
  %v1197 = vadd.f32 0.0, %v1196
  %v1198 = vpop.f32.mrf.mxu0
  %v1199 = vadd.f32 0.0, %v1198
  %1200 = vmatmul.bf16.gmra.mxu0 %v1104
  %v1201 = vpop.f32.mrf.mxu0
  %v1202 = vadd.f32 0.0, %v1201
  %v1203 = vpop.f32.mrf.mxu0
  %v1204 = vadd.f32 0.0, %v1203
  %1205 = vmatmul.bf16.gmra.mxu0 %v1105
  %v1206 = vpop.f32.mrf.mxu0
  %v1207 = vadd.f32 0.0, %v1206
  %v1208 = vpop.f32.mrf.mxu0
  %v1209 = vadd.f32 0.0, %v1208
  %1210 = vmatmul.bf16.gmra.mxu0 %v1106
  %v1211 = vpop.f32.mrf.mxu0
  %v1212 = vadd.f32 0.0, %v1211
  %v1213 = vpop.f32.mrf.mxu0
  %v1214 = vadd.f32 0.0, %v1213
  %1215 = vmatmul.bf16.gmra.mxu0 %v1107
  %v1216 = vpop.f32.mrf.mxu0
  %v1217 = vadd.f32 0.0, %v1216
  %v1218 = vpop.f32.mrf.mxu0
  %v1219 = vadd.f32 0.0, %v1218
  %1220 = vmatmul.bf16.gmra.mxu0 %v1108
  %v1221 = vpop.f32.mrf.mxu0
  %v1222 = vadd.f32 0.0, %v1221
  %v1223 = vpop.f32.mrf.mxu0
  %v1224 = vadd.f32 0.0, %v1223
  %1225 = vmatmul.bf16.gmra.mxu0 %v1109
  %v1226 = vpop.f32.mrf.mxu0
  %v1227 = vadd.f32 0.0, %v1226
  %v1228 = vpop.f32.mrf.mxu0
  %v1229 = vadd.f32 0.0, %v1228
  %1230 = vmatmul.bf16.gmra.mxu0 %v1110
  %v1231 = vpop.f32.mrf.mxu0
  %v1232 = vadd.f32 0.0, %v1231
  %v1233 = vpop.f32.mrf.mxu0
  %v1234 = vadd.f32 0.0, %v1233
  %1235 = vmatmul.bf16.gmra.mxu0 %v1111
  %v1236 = vpop.f32.mrf.mxu0
  %v1237 = vadd.f32 0.0, %v1236
  %v1238 = vpop.f32.mrf.mxu0
  %v1239 = vadd.f32 0.0, %v1238
  %1240 = vmatmul.bf16.gmra.mxu0 %v1112
  %v1241 = vpop.f32.mrf.mxu0
  %v1242 = vadd.f32 0.0, %v1241
  %v1243 = vpop.f32.mrf.mxu0
  %v1244 = vadd.f32 0.0, %v1243
  %1245 = vmatmul.bf16.gmra.mxu0 %v1113
  %v1246 = vpop.f32.mrf.mxu0
  %v1247 = vadd.f32 0.0, %v1246
  %v1248 = vpop.f32.mrf.mxu0
  %v1249 = vadd.f32 0.0, %v1248
  %1250 = vmatmul.bf16.gmra.mxu0 %v1114
  %v1251 = vpop.f32.mrf.mxu0
  %v1252 = vadd.f32 0.0, %v1251
  %v1253 = vpop.f32.mrf.mxu0
  %v1254 = vadd.f32 0.0, %v1253
  %1255 = vmatmul.bf16.gmra.mxu0 %v1115
  %v1256 = vpop.f32.mrf.mxu0
  %v1257 = vadd.f32 0.0, %v1256
  %v1258 = vpop.f32.mrf.mxu0
  %v1259 = vadd.f32 0.0, %v1258
  %1260 = vmatmul.bf16.gmra.mxu0 %v1116
  %v1261 = vpop.f32.mrf.mxu0
  %v1262 = vadd.f32 0.0, %v1261
  %v1263 = vpop.f32.mrf.mxu0
  %v1264 = vadd.f32 0.0, %v1263
  %1265 = vmatmul.bf16.gmra.mxu0 %v1117
  %v1266 = vpop.f32.mrf.mxu0
  %v1267 = vadd.f32 0.0, %v1266
  %v1268 = vpop.f32.mrf.mxu0
  %v1269 = vadd.f32 0.0, %v1268
  %1270 = vdwg.mxu0
  %v1271 = vadd.f32 %v843, %v1192
  %v1272 = vadd.f32 %v845, %v1194
  %v1273 = vadd.f32 %v848, %v1197
  %v1274 = vadd.f32 %v850, %v1199
  %v1275 = vadd.f32 %v853, %v1202
  %v1276 = vadd.f32 %v855, %v1204
  %v1277 = vadd.f32 %v858, %v1207
  %v1278 = vadd.f32 %v860, %v1209
  %v1279 = vadd.f32 %v863, %v1212
  %v1280 = vadd.f32 %v865, %v1214
  %v1281 = vadd.f32 %v868, %v1217
  %v1282 = vadd.f32 %v870, %v1219
  %v1283 = vadd.f32 %v873, %v1222
  %v1284 = vadd.f32 %v875, %v1224
  %v1285 = vadd.f32 %v878, %v1227
  %v1286 = vadd.f32 %v880, %v1229
  %v1287 = vadd.f32 %v883, %v1232
  %v1288 = vadd.f32 %v885, %v1234
  %v1289 = vadd.f32 %v888, %v1237
  %v1290 = vadd.f32 %v890, %v1239
  %v1291 = vadd.f32 %v893, %v1242
  %v1292 = vadd.f32 %v895, %v1244
  %v1293 = vadd.f32 %v898, %v1247
  %v1294 = vadd.f32 %v900, %v1249
  %v1295 = vadd.f32 %v903, %v1252
  %v1296 = vadd.f32 %v905, %v1254
  %v1297 = vadd.f32 %v908, %v1257
  %v1298 = vadd.f32 %v910, %v1259
  %v1299 = vadd.f32 %v913, %v1262
  %v1300 = vadd.f32 %v915, %v1264
  %v1301 = vadd.f32 %v918, %v1267
  %v1302 = vadd.f32 %v920, %v1269
  %v1303 = vld [vmem:[%s2] sm:$0x1]
  %v1305 = vperm.slane %v1303, 0
  %v1307 = vadd.f32 %v1271, %v1305
  %v1308 = vadd.f32 %v1272, %v1305
  %v1309 = vadd.f32 %v1273, %v1305
  %v1310 = vadd.f32 %v1274, %v1305
  %v1311 = vadd.f32 %v1275, %v1305
  %v1312 = vadd.f32 %v1276, %v1305
  %v1313 = vadd.f32 %v1277, %v1305
  %v1314 = vadd.f32 %v1278, %v1305
  %v1315 = vadd.f32 %v1279, %v1305
  %v1316 = vadd.f32 %v1280, %v1305
  %v1317 = vadd.f32 %v1281, %v1305
  %v1318 = vadd.f32 %v1282, %v1305
  %v1319 = vadd.f32 %v1283, %v1305
  %v1320 = vadd.f32 %v1284, %v1305
  %v1321 = vadd.f32 %v1285, %v1305
  %v1322 = vadd.f32 %v1286, %v1305
  %v1323 = vadd.f32 %v1287, %v1305
  %v1324 = vadd.f32 %v1288, %v1305
  %v1325 = vadd.f32 %v1289, %v1305
  %v1326 = vadd.f32 %v1290, %v1305
  %v1327 = vadd.f32 %v1291, %v1305
  %v1328 = vadd.f32 %v1292, %v1305
  %v1329 = vadd.f32 %v1293, %v1305
  %v1330 = vadd.f32 %v1294, %v1305
  %v1331 = vadd.f32 %v1295, %v1305
  %v1332 = vadd.f32 %v1296, %v1305
  %v1333 = vadd.f32 %v1297, %v1305
  %v1334 = vadd.f32 %v1298, %v1305
  %v1335 = vadd.f32 %v1299, %v1305
  %v1336 = vadd.f32 %v1300, %v1305
  %v1337 = vadd.f32 %v1301, %v1305
  %v1338 = vadd.f32 %v1302, %v1305
  %v1339 = vmax.f32 %v1307, 0.0
  %v1340 = vmax.f32 %v1308, 0.0
  %v1341 = vmax.f32 %v1309, 0.0
  %v1342 = vmax.f32 %v1310, 0.0
  %v1343 = vmax.f32 %v1311, 0.0
  %v1344 = vmax.f32 %v1312, 0.0
  %v1345 = vmax.f32 %v1313, 0.0
  %v1346 = vmax.f32 %v1314, 0.0
  %v1347 = vmax.f32 %v1315, 0.0
  %v1348 = vmax.f32 %v1316, 0.0
  %v1349 = vmax.f32 %v1317, 0.0
  %v1350 = vmax.f32 %v1318, 0.0
  %v1351 = vmax.f32 %v1319, 0.0
  %v1352 = vmax.f32 %v1320, 0.0
  %v1353 = vmax.f32 %v1321, 0.0
  %v1354 = vmax.f32 %v1322, 0.0
  %v1355 = vmax.f32 %v1323, 0.0
  %v1356 = vmax.f32 %v1324, 0.0
  %v1357 = vmax.f32 %v1325, 0.0
  %v1358 = vmax.f32 %v1326, 0.0
  %v1359 = vmax.f32 %v1327, 0.0
  %v1360 = vmax.f32 %v1328, 0.0
  %v1361 = vmax.f32 %v1329, 0.0
  %v1362 = vmax.f32 %v1330, 0.0
  %v1363 = vmax.f32 %v1331, 0.0
  %v1364 = vmax.f32 %v1332, 0.0
  %v1365 = vmax.f32 %v1333, 0.0
  %v1366 = vmax.f32 %v1334, 0.0
  %v1367 = vmax.f32 %v1335, 0.0
  %v1368 = vmax.f32 %v1336, 0.0
  %v1369 = vmax.f32 %v1337, 0.0
  %v1370 = vmax.f32 %v1338, 0.0
  %vm1371 = vcmask 1041408
  %v1372 = vsel %vm1371, %v1340, -inf
  %v1373 = vmax.f32 %v1339, %v1372
  %v1374 = vrot.slane %v1373, 4
  %v1375 = vmax.f32 %v1373, %v1374
  %v1376 = vrot.slane %v1375, 2
  %v1377 = vmax.f32 %v1375, %v1376
  %v1378 = vrot.slane %v1377, 1
  %v1379 = vmax.f32 %v1377, %v1378
  %v1380 = vsel %vm1371, %v1342, -inf
  %v1381 = vmax.f32 %v1341, %v1380
  %v1382 = vrot.slane %v1381, 4
  %v1383 = vmax.f32 %v1381, %v1382
  %v1384 = vrot.slane %v1383, 2
  %v1385 = vmax.f32 %v1383, %v1384
  %v1386 = vrot.slane %v1385, 1
  %v1387 = vmax.f32 %v1385, %v1386
  %v1388 = vsel %vm1371, %v1344, -inf
  %v1389 = vmax.f32 %v1343, %v1388
  %v1390 = vrot.slane %v1389, 4
  %v1391 = vmax.f32 %v1389, %v1390
  %v1392 = vrot.slane %v1391, 2
  %v1393 = vmax.f32 %v1391, %v1392
  %v1394 = vrot.slane %v1393, 1
  %v1395 = vmax.f32 %v1393, %v1394
  %v1396 = vsel %vm1371, %v1346, -inf
  %v1397 = vmax.f32 %v1345, %v1396
  %v1398 = vrot.slane %v1397, 4
  %v1399 = vmax.f32 %v1397, %v1398
  %v1400 = vrot.slane %v1399, 2
  %v1401 = vmax.f32 %v1399, %v1400
  %v1402 = vrot.slane %v1401, 1
  %v1403 = vmax.f32 %v1401, %v1402
  %v1404 = vsel %vm1371, %v1348, -inf
  %v1405 = vmax.f32 %v1347, %v1404
  %v1406 = vrot.slane %v1405, 4
  %v1407 = vmax.f32 %v1405, %v1406
  %v1408 = vrot.slane %v1407, 2
  %v1409 = vmax.f32 %v1407, %v1408
  %v1410 = vrot.slane %v1409, 1
  %v1411 = vmax.f32 %v1409, %v1410
  %v1412 = vsel %vm1371, %v1350, -inf
  %v1413 = vmax.f32 %v1349, %v1412
  %v1414 = vrot.slane %v1413, 4
  %v1415 = vmax.f32 %v1413, %v1414
  %v1416 = vrot.slane %v1415, 2
  %v1417 = vmax.f32 %v1415, %v1416
  %v1418 = vrot.slane %v1417, 1
  %v1419 = vmax.f32 %v1417, %v1418
  %v1420 = vsel %vm1371, %v1352, -inf
  %v1421 = vmax.f32 %v1351, %v1420
  %v1422 = vrot.slane %v1421, 4
  %v1423 = vmax.f32 %v1421, %v1422
  %v1424 = vrot.slane %v1423, 2
  %v1425 = vmax.f32 %v1423, %v1424
  %v1426 = vrot.slane %v1425, 1
  %v1427 = vmax.f32 %v1425, %v1426
  %v1428 = vsel %vm1371, %v1354, -inf
  %v1429 = vmax.f32 %v1353, %v1428
  %v1430 = vrot.slane %v1429, 4
  %v1431 = vmax.f32 %v1429, %v1430
  %v1432 = vrot.slane %v1431, 2
  %v1433 = vmax.f32 %v1431, %v1432
  %v1434 = vrot.slane %v1433, 1
  %v1435 = vmax.f32 %v1433, %v1434
  %v1436 = vsel %vm1371, %v1356, -inf
  %v1437 = vmax.f32 %v1355, %v1436
  %v1438 = vrot.slane %v1437, 4
  %v1439 = vmax.f32 %v1437, %v1438
  %v1440 = vrot.slane %v1439, 2
  %v1441 = vmax.f32 %v1439, %v1440
  %v1442 = vrot.slane %v1441, 1
  %v1443 = vmax.f32 %v1441, %v1442
  %v1444 = vsel %vm1371, %v1358, -inf
  %v1445 = vmax.f32 %v1357, %v1444
  %v1446 = vrot.slane %v1445, 4
  %v1447 = vmax.f32 %v1445, %v1446
  %v1448 = vrot.slane %v1447, 2
  %v1449 = vmax.f32 %v1447, %v1448
  %v1450 = vrot.slane %v1449, 1
  %v1451 = vmax.f32 %v1449, %v1450
  %v1452 = vsel %vm1371, %v1360, -inf
  %v1453 = vmax.f32 %v1359, %v1452
  %v1454 = vrot.slane %v1453, 4
  %v1455 = vmax.f32 %v1453, %v1454
  %v1456 = vrot.slane %v1455, 2
  %v1457 = vmax.f32 %v1455, %v1456
  %v1458 = vrot.slane %v1457, 1
  %v1459 = vmax.f32 %v1457, %v1458
  %v1460 = vsel %vm1371, %v1362, -inf
  %v1461 = vmax.f32 %v1361, %v1460
  %v1462 = vrot.slane %v1461, 4
  %v1463 = vmax.f32 %v1461, %v1462
  %v1464 = vrot.slane %v1463, 2
  %v1465 = vmax.f32 %v1463, %v1464
  %v1466 = vrot.slane %v1465, 1
  %v1467 = vmax.f32 %v1465, %v1466
  %v1468 = vsel %vm1371, %v1364, -inf
  %v1469 = vmax.f32 %v1363, %v1468
  %v1470 = vrot.slane %v1469, 4
  %v1471 = vmax.f32 %v1469, %v1470
  %v1472 = vrot.slane %v1471, 2
  %v1473 = vmax.f32 %v1471, %v1472
  %v1474 = vrot.slane %v1473, 1
  %v1475 = vmax.f32 %v1473, %v1474
  %v1476 = vsel %vm1371, %v1366, -inf
  %v1477 = vmax.f32 %v1365, %v1476
  %v1478 = vrot.slane %v1477, 4
  %v1479 = vmax.f32 %v1477, %v1478
  %v1480 = vrot.slane %v1479, 2
  %v1481 = vmax.f32 %v1479, %v1480
  %v1482 = vrot.slane %v1481, 1
  %v1483 = vmax.f32 %v1481, %v1482
  %v1484 = vsel %vm1371, %v1368, -inf
  %v1485 = vmax.f32 %v1367, %v1484
  %v1486 = vrot.slane %v1485, 4
  %v1487 = vmax.f32 %v1485, %v1486
  %v1488 = vrot.slane %v1487, 2
  %v1489 = vmax.f32 %v1487, %v1488
  %v1490 = vrot.slane %v1489, 1
  %v1491 = vmax.f32 %v1489, %v1490
  %v1492 = vsel %vm1371, %v1370, -inf
  %v1493 = vmax.f32 %v1369, %v1492
  %v1494 = vrot.slane %v1493, 4
  %v1495 = vmax.f32 %v1493, %v1494
  %v1496 = vrot.slane %v1495, 2
  %v1497 = vmax.f32 %v1495, %v1496
  %v1498 = vrot.slane %v1497, 1
  %v1499 = vmax.f32 %v1497, %v1498
  %v1500 = vld [vmem:[%s3] sm:$0xff]
  %v1501 = vld [vmem:[%s3 + $0x8] sm:$0xff]
  %v1502 = vld [vmem:[%s3 + $0x10] sm:$0xff]
  %v1503 = vld [vmem:[%s3 + $0x18] sm:$0xff]
  %v1504 = vld [vmem:[%s3 + $0x20] sm:$0xff]
  %v1505 = vld [vmem:[%s3 + $0x28] sm:$0xff]
  %v1506 = vld [vmem:[%s3 + $0x30] sm:$0xff]
  %v1507 = vld [vmem:[%s3 + $0x38] sm:$0xff]
  %v1508 = vld [vmem:[%s3 + $0x40] sm:$0xff]
  %v1509 = vld [vmem:[%s3 + $0x48] sm:$0xff]
  %v1510 = vld [vmem:[%s3 + $0x50] sm:$0xff]
  %v1511 = vld [vmem:[%s3 + $0x58] sm:$0xff]
  %v1512 = vld [vmem:[%s3 + $0x60] sm:$0xff]
  %v1513 = vld [vmem:[%s3 + $0x68] sm:$0xff]
  %v1514 = vld [vmem:[%s3 + $0x70] sm:$0xff]
  %v1515 = vld [vmem:[%s3 + $0x78] sm:$0xff]
  %v1516 = vld [vmem:[%s4] sm:$0x1]
  %v1518 = vperm.slane %v1516, 0
  %vm1536 = vcmask 1041409
  %v1537 = vsel %vm1536, %v1387, %v1379
  %vm1538 = vcmask 1042434
  %v1539 = vsel %vm1538, %v1395, %v1537
  %vm1540 = vcmask 1043459
  %v1541 = vsel %vm1540, %v1403, %v1539
  %vm1542 = vcmask 1044484
  %v1543 = vsel %vm1542, %v1411, %v1541
  %vm1544 = vcmask 1045509
  %v1545 = vsel %vm1544, %v1419, %v1543
  %vm1546 = vcmask 1046534
  %v1547 = vsel %vm1546, %v1427, %v1545
  %vm1548 = vcmask 1047559
  %v1549 = vsel %vm1548, %v1435, %v1547
  %v1550 = vsel %vm1536, %v1451, %v1443
  %v1551 = vsel %vm1538, %v1459, %v1550
  %v1552 = vsel %vm1540, %v1467, %v1551
  %v1553 = vsel %vm1542, %v1475, %v1552
  %v1554 = vsel %vm1544, %v1483, %v1553
  %v1555 = vsel %vm1546, %v1491, %v1554
  %v1556 = vsel %vm1548, %v1499, %v1555
  %1559 = vmatpush.msra.mxu0 %v1515
  %1560 = vmatpush.msra.mxu0 %v1514
  %1561 = vmatpush.msra.mxu0 %v1513
  %1562 = vmatpush.msra.mxu0 %v1512
  %1563 = vmatpush.msra.mxu0 %v1511
  %1564 = vmatpush.msra.mxu0 %v1510
  %1565 = vmatpush.msra.mxu0 %v1509
  %1566 = vmatpush.msra.mxu0 %v1508
  %1567 = vmatpush.msra.mxu0 %v1507
  %1568 = vmatpush.msra.mxu0 %v1506
  %1569 = vmatpush.msra.mxu0 %v1505
  %1570 = vmatpush.msra.mxu0 %v1504
  %1571 = vmatpush.msra.mxu0 %v1503
  %1572 = vmatpush.msra.mxu0 %v1502
  %1573 = vmatpush.msra.mxu0 %v1501
  %1574 = vmatpush.msra.mxu0 %v1500
  %1575 = vmatmul.f32.gmra.mxu0 %v1549
  %v1576 = vpop.f32.mrf.mxu0
  %v1577 = vadd.f32 %v1518, %v1576
  %1578 = vmatmul.f32.gmra.mxu0 %v1556
  %v1579 = vpop.f32.mrf.mxu0
  %v1580 = vadd.f32 %v1518, %v1579
  %1581 = vdwg.mxu0
  %1582 = vst [vmem:[%s5] sm:$0xff] %v1577
  %1583 = vst [vmem:[%s5 + $0x8] sm:$0xff] %v1580
  // Predicated region
  $region22: #{convnet_for_text.1} parent=0 // pred_check
    _
  $region23: #{convnet_for_text.1} parent=0 // pred_check_branch
    %1585 = sbr.rel (0) target = $region25
  $region24: #{convnet_for_text.1} parent=0 // pred_region
    _
  $region25: #{convnet_for_text.1} parent=0 // pred_fallthru
    _
  // Predicated region
  $region26: #{convnet_for_text.1} parent=0 // pred_check
    _
  $region27: #{convnet_for_text.1} parent=0 // pred_check_branch
    %1587 = sbr.rel (0) target = $region29
  $region28: #{convnet_for_text.1} parent=0 // pred_region
    _
  $region29: #{convnet_for_text.1} parent=0 // pred_fallthru
    _

</llo_original>
